<compile_context>
chip_gen: v7x
topology: tpu7x:2x2x1
jax: 0.10.0
libtpu: 0.0.40
codegen_flags: <defaults>
</compile_context>

<pallas_src>
import functools
import numpy as np
import jax
import jax.numpy as jnp
from jax.experimental import pallas as pl
from jax.experimental.pallas import tpu as pltpu


# ----------------------------- Pallas kernel ------------------------------- #

def _bn_running_kernel(x_ref, gamma_ref, beta_ref, rmean_ref, rvar_ref,
                       xhat_ref, nrm_ref, nrv_ref, ld_ref,
                       *, eps, momentum, batch, training):
    """Fused BatchNorm_running forward on one (B, TN) feature-column tile.

    x_ref     : (B, TN) input tile (native dtype)
    gamma_ref : (1, TN) log-scale parameter
    beta_ref  : (1, TN) shift parameter
    rmean_ref : (1, TN) running mean (input)
    rvar_ref  : (1, TN) running var  (input)
    xhat_ref  : (B, TN) normalized output (native dtype)
    nrm_ref   : (1, TN) updated running mean
    nrv_ref   : (1, TN) updated running var
    ld_ref    : (1, TN) per-feature log-det contributions (summed in wrapper)
    """
    x = x_ref[...].astype(jnp.float32)
    gamma = gamma_ref[...]
    beta = beta_ref[...]

    if training:
        # torch.var default is unbiased (ddof=1); batch==1 gives nan like torch.
        inv_b = 1.0 / batch
        inv_bm1 = 1.0 / (batch - 1) if batch > 1 else float("nan")
        m = jnp.sum(x, axis=0, keepdims=True) * inv_b                  # (1, TN)
        centered = x - m
        v = jnp.sum(centered * centered, axis=0, keepdims=True) * inv_bm1 + eps
        # running-stat EMA: rm *= 1-mom; rm += mom*m  (same for var)
        nrm_ref[...] = (1.0 - momentum) * rmean_ref[...] + momentum * m
        nrv_ref[...] = (1.0 - momentum) * rvar_ref[...] + momentum * v
    else:
        m = rmean_ref[...]
        v = rvar_ref[...]
        centered = x - m
        nrm_ref[...] = rmean_ref[...]
        nrv_ref[...] = rvar_ref[...]

    # Fold 1/sqrt(v) and exp(gamma) into a single (1, TN) row first (EUP ops),
    # then do ONE broadcast multiply over the (B, TN) block.
    scale = jax.lax.rsqrt(v) * jnp.exp(gamma)
    xhat_ref[...] = (centered * scale + beta).astype(xhat_ref.dtype)

    # log_det = sum(gamma) - 0.5 * sum(log(v)); emit per-feature row, wrapper sums.
    ld_ref[...] = gamma - 0.5 * jnp.log(v)


# ------------------------------ tile sizing --------------------------------- #

def _choose_tile_n(batch, d, x_itemsize):
    """Widest lane tile whose pipelined buffers fit a conservative VMEM budget."""
    budget = 8 * 1024 * 1024            # fits v5e 16 MiB default scoped VMEM easily
    # per lane column: x tile + xhat tile, each double-buffered, + tiny param rows
    per_lane = 4 * batch * x_itemsize + 64
    cap = max(budget // per_lane, 1)
    if d <= cap:
        return d                        # one tile covers all features (no padding)
    tn = (cap // 128) * 128
    # TODO(synk): for very large batch (cap < 128) add a second grid axis over
    # batch with f32 sum/sum-sq (Welford) accumulators instead of shrinking TN.
    return min(max(tn, 128), d)


# ------------------------------- wrapper ------------------------------------ #

def batchnorm_running_forward(x, gamma, beta, running_mean, running_var,
                              *, eps=1e-5, momentum=0.01, training=True,
                              tile_n=None):
    """Returns (x_hat, log_det, new_running_mean, new_running_var)."""
    b, d = x.shape
    out_dtype = x.dtype

    # Parameter rows are tiny; cast/reshape once here (negligible I/O).
    gamma = gamma.reshape(1, d).astype(jnp.float32)
    beta = beta.reshape(1, d).astype(jnp.float32)
    rmean = running_mean.reshape(1, d).astype(jnp.float32)
    rvar = running_var.reshape(1, d).astype(jnp.float32)

    tn = _choose_tile_n(b, d, jnp.dtype(x.dtype).itemsize) if tile_n is None else tile_n
    grid = (pl.cdiv(d, tn),)

    kernel = functools.partial(_bn_running_kernel, eps=float(eps),
                               momentum=float(momentum), batch=b,
                               training=bool(training))

    col = lambda j: (0, j)   # every array is tiled only along the feature axis

    xhat, nrm, nrv, ld_rows = pl.pallas_call(
        kernel,
        grid=grid,
        in_specs=[
            pl.BlockSpec((b, tn), col),   # x
            pl.BlockSpec((1, tn), col),   # gamma
            pl.BlockSpec((1, tn), col),   # beta
            pl.BlockSpec((1, tn), col),   # running_mean
            pl.BlockSpec((1, tn), col),   # running_var
        ],
        out_specs=(
            pl.BlockSpec((b, tn), col),   # x_hat
            pl.BlockSpec((1, tn), col),   # new running_mean
            pl.BlockSpec((1, tn), col),   # new running_var
            pl.BlockSpec((1, tn), col),   # per-feature log-det contributions
        ),
        out_shape=(
            jax.ShapeDtypeStruct((b, d), out_dtype),
            jax.ShapeDtypeStruct((1, d), jnp.float32),
            jax.ShapeDtypeStruct((1, d), jnp.float32),
            jax.ShapeDtypeStruct((1, d), jnp.float32),
        ),
        compiler_params=pltpu.CompilerParams(
            dimension_semantics=("parallel",)),
    )(x, gamma, beta, rmean, rvar)

    log_det = jnp.sum(ld_rows)           # tiny (1, D) reduction outside the kernel
    return xhat, log_det, nrm, nrv


# --------------------------------- main ------------------------------------- #

def _np_reference(xn, gn, bn, rm0, rv0, eps, momentum, training):
    if training:
        m = xn.mean(axis=0, keepdims=True)
        v = xn.var(axis=0, ddof=1, keepdims=True) + eps
        rm = (1.0 - momentum) * rm0 + momentum * m
        rv = (1.0 - momentum) * rv0 + momentum * v
    else:
        m, v = rm0, rv0
        rm, rv = rm0, rv0
    xhat = (xn - m) / np.sqrt(v) * np.exp(gn) + bn
    logdet = np.sum(gn) - 0.5 * np.sum(np.log(v))
    return xhat, logdet, rm, rv


if __name__ == "__main__":
    eps, momentum = 1e-5, 0.01
    key = jax.random.PRNGKey(0)

    # ---------------- small case (single feature tile, grid=(1,)) ----------------
    batch, dim = 8, 16
    kx, kg, kb, k2x, k2g, k2b = jax.random.split(key, 6)
    x = jax.random.normal(kx, (batch, dim), jnp.float32)
    # module initializes gamma/beta to zeros; use small random values so the
    # affine + log-det paths are actually exercised by the correctness check.
    gamma = 0.1 * jax.random.normal(kg, (1, dim), jnp.float32)
    beta = 0.1 * jax.random.normal(kb, (1, dim), jnp.float32)
    running_mean = jnp.zeros((1, dim), jnp.float32)
    running_var = jnp.ones((1, dim), jnp.float32)

    fwd_train = jax.jit(functools.partial(
        batchnorm_running_forward, eps=eps, momentum=momentum, training=True))
    fwd_eval = jax.jit(functools.partial(
        batchnorm_running_forward, eps=eps, momentum=momentum, training=False))

    # training-mode forward (nn.Module default)
    x_hat, log_det, new_rm, new_rv = fwd_train(x, gamma, beta,
                                               running_mean, running_var)
    jax.block_until_ready((x_hat, log_det, new_rm, new_rv))

    xn, gn, bn = np.asarray(x), np.asarray(gamma), np.asarray(beta)
    xhat_ref, logdet_ref, rm_ref, rv_ref = _np_reference(
        xn, gn, bn, np.asarray(running_mean), np.asarray(running_var),
        eps, momentum, training=True)
    np.testing.assert_allclose(np.asarray(x_hat), xhat_ref, rtol=1e-5, atol=1e-5)
    np.testing.assert_allclose(float(log_det), logdet_ref, rtol=1e-5, atol=1e-5)
    np.testing.assert_allclose(np.asarray(new_rm), rm_ref, rtol=1e-5, atol=1e-5)
    np.testing.assert_allclose(np.asarray(new_rv), rv_ref, rtol=1e-5, atol=1e-5)

    # eval-mode forward (uses running statistics; no +eps, matching the module)
    x_hat_e, log_det_e, _, _ = fwd_eval(x, gamma, beta, new_rm, new_rv)
    jax.block_until_ready((x_hat_e, log_det_e))
    xhat_e_ref, logdet_e_ref, _, _ = _np_reference(
        xn, gn, bn, rm_ref, rv_ref, eps, momentum, training=False)
    np.testing.assert_allclose(np.asarray(x_hat_e), xhat_e_ref, rtol=1e-5, atol=1e-5)
    np.testing.assert_allclose(float(log_det_e), logdet_e_ref, rtol=1e-5, atol=1e-5)
    assert x_hat.shape == (batch, dim)

    # ------------- tiled case (grid over features incl. partial last tile) -------
    b2, d2, tn2 = 16, 320, 128           # grid = 3 tiles, last tile is partial
    x2 = jax.random.normal(k2x, (b2, d2), jnp.float32)
    gamma2 = 0.05 * jax.random.normal(k2g, (1, d2), jnp.float32)
    beta2 = 0.05 * jax.random.normal(k2b, (1, d2), jnp.float32)
    rm2_0 = jnp.zeros((1, d2), jnp.float32)
    rv2_0 = jnp.ones((1, d2), jnp.float32)

    fwd_train_tiled = jax.jit(functools.partial(
        batchnorm_running_forward, eps=eps, momentum=momentum,
        training=True, tile_n=tn2))
    x_hat2, log_det2, new_rm2, new_rv2 = fwd_train_tiled(
        x2, gamma2, beta2, rm2_0, rv2_0)
    jax.block_until_ready((x_hat2, log_det2, new_rm2, new_rv2))

    xhat2_ref, logdet2_ref, rm2_ref, rv2_ref = _np_reference(
        np.asarray(x2), np.asarray(gamma2), np.asarray(beta2),
        np.asarray(rm2_0), np.asarray(rv2_0), eps, momentum, training=True)
    np.testing.assert_allclose(np.asarray(x_hat2), xhat2_ref, rtol=1e-5, atol=1e-5)
    np.testing.assert_allclose(float(log_det2), logdet2_ref, rtol=1e-5, atol=1e-5)
    np.testing.assert_allclose(np.asarray(new_rm2), rm2_ref, rtol=1e-5, atol=1e-5)
    np.testing.assert_allclose(np.asarray(new_rv2), rv2_ref, rtol=1e-5, atol=1e-5)

    print("KERNEL_OK")
</pallas_src>

<mosaic_0001>
module attributes {stable_mosaic.version = 11 : i64} {
  func.func @_bn_running_kernel(%arg0: i32, %arg1: memref<8x16xf32, #tpu.memory_space<vmem>>, %arg2: memref<1x16xf32, #tpu.memory_space<vmem>>, %arg3: memref<1x16xf32, #tpu.memory_space<vmem>>, %arg4: memref<1x16xf32, #tpu.memory_space<vmem>>, %arg5: memref<1x16xf32, #tpu.memory_space<vmem>>, %arg6: memref<8x16xf32, #tpu.memory_space<vmem>>, %arg7: memref<1x16xf32, #tpu.memory_space<vmem>>, %arg8: memref<1x16xf32, #tpu.memory_space<vmem>>, %arg9: memref<1x16xf32, #tpu.memory_space<vmem>>) attributes {dimension_semantics = [#tpu.dimension_semantics<parallel>], iteration_bounds = array<i64: 1>, scalar_prefetch = 0 : i64, scratch_operands = 0 : i64, tpu.core_type = #tpu.core_type<tc>, window_params = [{transform_indices = @transform_0, window_bounds = array<i64: 8, 16>}, {transform_indices = @transform_1, window_bounds = array<i64: 1, 16>}, {transform_indices = @transform_2, window_bounds = array<i64: 1, 16>}, {transform_indices = @transform_3, window_bounds = array<i64: 1, 16>}, {transform_indices = @transform_4, window_bounds = array<i64: 1, 16>}, {transform_indices = @transform_5, window_bounds = array<i64: 8, 16>}, {transform_indices = @transform_6, window_bounds = array<i64: 1, 16>}, {transform_indices = @transform_7, window_bounds = array<i64: 1, 16>}, {transform_indices = @transform_8, window_bounds = array<i64: 1, 16>}]} {
    %c0 = arith.constant 0 : index
    %c0_0 = arith.constant 0 : index
    %0 = vector.load %arg1[%c0, %c0_0] : memref<8x16xf32, #tpu.memory_space<vmem>>, vector<8x16xf32>
    %c0_1 = arith.constant 0 : index
    %c0_2 = arith.constant 0 : index
    %1 = vector.load %arg2[%c0_1, %c0_2] : memref<1x16xf32, #tpu.memory_space<vmem>>, vector<1x16xf32>
    %c0_3 = arith.constant 0 : index
    %c0_4 = arith.constant 0 : index
    %2 = vector.load %arg3[%c0_3, %c0_4] : memref<1x16xf32, #tpu.memory_space<vmem>>, vector<1x16xf32>
    %cst = arith.constant dense<0.000000e+00> : vector<16xf32>
    %3 = vector.multi_reduction <add>, %0, %cst [0] : vector<8x16xf32> to vector<16xf32>
    %4 = vector.shape_cast %3 : vector<16xf32> to vector<1x16xf32>
    %cst_5 = arith.constant 1.250000e-01 : f32
    %5 = vector.broadcast %cst_5 : f32 to vector<1x16xf32>
    %6 = arith.mulf %4, %5 : vector<1x16xf32>
    %7 = vector.broadcast %6 : vector<1x16xf32> to vector<8x16xf32>
    %8 = arith.subf %0, %7 : vector<8x16xf32>
    %9 = arith.mulf %8, %8 : vector<8x16xf32>
    %cst_6 = arith.constant dense<0.000000e+00> : vector<16xf32>
    %10 = vector.multi_reduction <add>, %9, %cst_6 [0] : vector<8x16xf32> to vector<16xf32>
    %11 = vector.shape_cast %10 : vector<16xf32> to vector<1x16xf32>
    %cst_7 = arith.constant 0.142857149 : f32
    %12 = vector.broadcast %cst_7 : f32 to vector<1x16xf32>
    %13 = arith.mulf %11, %12 : vector<1x16xf32>
    %cst_8 = arith.constant 9.99999974E-6 : f32
    %14 = vector.broadcast %cst_8 : f32 to vector<1x16xf32>
    %15 = arith.addf %13, %14 : vector<1x16xf32>
    %c0_9 = arith.constant 0 : index
    %c0_10 = arith.constant 0 : index
    %16 = vector.load %arg4[%c0_9, %c0_10] : memref<1x16xf32, #tpu.memory_space<vmem>>, vector<1x16xf32>
    %cst_11 = arith.constant 9.900000e-01 : f32
    %17 = vector.broadcast %cst_11 : f32 to vector<1x16xf32>
    %18 = arith.mulf %17, %16 : vector<1x16xf32>
    %cst_12 = arith.constant 0.00999999977 : f32
    %19 = vector.broadcast %cst_12 : f32 to vector<1x16xf32>
    %20 = arith.mulf %19, %6 : vector<1x16xf32>
    %21 = arith.addf %18, %20 : vector<1x16xf32>
    %c0_13 = arith.constant 0 : index
    %c0_14 = arith.constant 0 : index
    %22 = vector.load %arg7[%c0_13, %c0_14] : memref<1x16xf32, #tpu.memory_space<vmem>>, vector<1x16xf32>
    tpu.vector_store %arg7[%c0_13, %c0_14], %21 {strides = array<i32>} : memref<1x16xf32, #tpu.memory_space<vmem>>, vector<1x16xf32>,
    %c0_15 = arith.constant 0 : index
    %c0_16 = arith.constant 0 : index
    %23 = vector.load %arg5[%c0_15, %c0_16] : memref<1x16xf32, #tpu.memory_space<vmem>>, vector<1x16xf32>
    %cst_17 = arith.constant 9.900000e-01 : f32
    %24 = vector.broadcast %cst_17 : f32 to vector<1x16xf32>
    %25 = arith.mulf %24, %23 : vector<1x16xf32>
    %cst_18 = arith.constant 0.00999999977 : f32
    %26 = vector.broadcast %cst_18 : f32 to vector<1x16xf32>
    %27 = arith.mulf %26, %15 : vector<1x16xf32>
    %28 = arith.addf %25, %27 : vector<1x16xf32>
    %c0_19 = arith.constant 0 : index
    %c0_20 = arith.constant 0 : index
    %29 = vector.load %arg8[%c0_19, %c0_20] : memref<1x16xf32, #tpu.memory_space<vmem>>, vector<1x16xf32>
    tpu.vector_store %arg8[%c0_19, %c0_20], %28 {strides = array<i32>} : memref<1x16xf32, #tpu.memory_space<vmem>>, vector<1x16xf32>,
    %30 = math.rsqrt %15 : vector<1x16xf32>
    %31 = math.exp %1 : vector<1x16xf32>
    %32 = arith.mulf %30, %31 : vector<1x16xf32>
    %33 = vector.broadcast %32 : vector<1x16xf32> to vector<8x16xf32>
    %34 = arith.mulf %8, %33 : vector<8x16xf32>
    %35 = vector.broadcast %2 : vector<1x16xf32> to vector<8x16xf32>
    %36 = arith.addf %34, %35 : vector<8x16xf32>
    %c0_21 = arith.constant 0 : index
    %c0_22 = arith.constant 0 : index
    %37 = vector.load %arg6[%c0_21, %c0_22] : memref<8x16xf32, #tpu.memory_space<vmem>>, vector<8x16xf32>
    tpu.vector_store %arg6[%c0_21, %c0_22], %36 {strides = array<i32>} : memref<8x16xf32, #tpu.memory_space<vmem>>, vector<8x16xf32>,
    %38 = math.log %15 : vector<1x16xf32>
    %cst_23 = arith.constant 5.000000e-01 : f32
    %39 = vector.broadcast %cst_23 : f32 to vector<1x16xf32>
    %40 = arith.mulf %39, %38 : vector<1x16xf32>
    %41 = arith.subf %1, %40 : vector<1x16xf32>
    %c0_24 = arith.constant 0 : index
    %c0_25 = arith.constant 0 : index
    %42 = vector.load %arg9[%c0_24, %c0_25] : memref<1x16xf32, #tpu.memory_space<vmem>>, vector<1x16xf32>
    tpu.vector_store %arg9[%c0_24, %c0_25], %41 {strides = array<i32>} : memref<1x16xf32, #tpu.memory_space<vmem>>, vector<1x16xf32>,
    return
  }
  func.func @transform_0(%arg0: i32) -> (i32, i32) {
    %c0_i32 = arith.constant 0 : i32
    %c0_i32_0 = arith.constant 0 : i32
    return %c0_i32, %arg0 : i32, i32
  }
  func.func @transform_1(%arg0: i32) -> (i32, i32) {
    %c0_i32 = arith.constant 0 : i32
    %c0_i32_0 = arith.constant 0 : i32
    return %c0_i32, %arg0 : i32, i32
  }
  func.func @transform_2(%arg0: i32) -> (i32, i32) {
    %c0_i32 = arith.constant 0 : i32
    %c0_i32_0 = arith.constant 0 : i32
    return %c0_i32, %arg0 : i32, i32
  }
  func.func @transform_3(%arg0: i32) -> (i32, i32) {
    %c0_i32 = arith.constant 0 : i32
    %c0_i32_0 = arith.constant 0 : i32
    return %c0_i32, %arg0 : i32, i32
  }
  func.func @transform_4(%arg0: i32) -> (i32, i32) {
    %c0_i32 = arith.constant 0 : i32
    %c0_i32_0 = arith.constant 0 : i32
    return %c0_i32, %arg0 : i32, i32
  }
  func.func @transform_5(%arg0: i32) -> (i32, i32) {
    %c0_i32 = arith.constant 0 : i32
    %c0_i32_0 = arith.constant 0 : i32
    return %c0_i32, %arg0 : i32, i32
  }
  func.func @transform_6(%arg0: i32) -> (i32, i32) {
    %c0_i32 = arith.constant 0 : i32
    %c0_i32_0 = arith.constant 0 : i32
    return %c0_i32, %arg0 : i32, i32
  }
  func.func @transform_7(%arg0: i32) -> (i32, i32) {
    %c0_i32 = arith.constant 0 : i32
    %c0_i32_0 = arith.constant 0 : i32
    return %c0_i32, %arg0 : i32, i32
  }
  func.func @transform_8(%arg0: i32) -> (i32, i32) {
    %c0_i32 = arith.constant 0 : i32
    %c0_i32_0 = arith.constant 0 : i32
    return %c0_i32, %arg0 : i32, i32
  }
}

</mosaic_0001>

<llo_original>
// kernel: batchnorm_running_forward.1
$region0: #{batchnorm_running_forward.1}
  #allocation0 [shape = 'u32[]', space=smem, size = 0x4, offset = 0x4, fixed_abs, tag = 'smem constant byte address 0x4 - core index']
  #allocation1 [shape = 'u32[144,128]{1,0:T(1,128)}', space=vmem, size = 0x12000, scoped, tag = 'internal scratch']
  %s0 = inlined_call_operand.hbm [shape: f32[8,16], index: 0, kind: input, shape index: {}]
  %s1 = inlined_call_operand.vmem [shape: f32[1,16], index: 1, kind: input, shape index: {}]
  %s2 = inlined_call_operand.vmem [shape: f32[1,16], index: 2, kind: input, shape index: {}]
  %s3 = inlined_call_operand.vmem [shape: f32[1,16], index: 3, kind: input, shape index: {}]
  %s4 = inlined_call_operand.vmem [shape: f32[1,16], index: 4, kind: input, shape index: {}]
  %s5 = inlined_call_operand.hbm [shape: f32[8,16], index: 5, kind: output, shape index: {0}]
  %s6 = inlined_call_operand.hbm [shape: f32[1,16], index: 6, kind: output, shape index: {1}]
  %s7 = inlined_call_operand.hbm [shape: f32[1,16], index: 7, kind: output, shape index: {2}]
  %s8 = inlined_call_operand.vmem [shape: f32[1,16], index: 8, kind: output, shape index: {3}]
  %9 = xla_tuple %s5, %s6, %s7, %s8
  %s10 = sld [smem:[#allocation0]]
  $region58: #{batchnorm_running_forward.1} parent=0
    _
  %s12 = ssub.s32 1, %s10
  %s13 = scalar_select 0, %s12, %s10
  $region1: #{batchnorm_running_forward.1} parent=0
    #allocation2 [shape = 'u8[4096]{0}', space=vmem, size = 0x1000, scoped, tag = 'input window, operand 0, single buffered']
    #allocation3 [shape = 's32[1]{0}', space=sflag, size = 0x4, scoped, tag = 'scoped memory for batchnorm_running_forward.1']
    #allocation4 [shape = 's32[1]{0}', space=sflag, size = 0x4, scoped, tag = 'scoped memory for batchnorm_running_forward.1']
    #allocation5 [shape = 'u8[4096]{0}', space=vmem, size = 0x1000, scoped, tag = 'output window, operand 0, single buffered']
    #allocation6 [shape = 'u8[512]{0}', space=vmem, size = 0x400, scoped, tag = 'output window, operand 1, single buffered']
    #allocation7 [shape = 's32[1]{0}', space=sflag, size = 0x4, scoped, tag = 'scoped memory for batchnorm_running_forward.1']
    #allocation8 [shape = 'u8[512]{0}', space=vmem, size = 0x400, scoped, tag = 'output window, operand 2, single buffered']
    %14 = vsyncpa [#allocation3], 0
    %15 = vsyncpa [#allocation4], 0
    %16 = vsyncpa [#allocation7], 0
    // Predicated region
    $region2: #{batchnorm_running_forward.1} parent=1 // pred_check
      _
    $region3: #{batchnorm_running_forward.1} parent=1 // pred_check_branch
      %18 = sbr.rel (0) target = $region5
    $region4: #{batchnorm_running_forward.1} parent=1 // pred_region
      %s20 = ssub.s32 128, 128
      %21 = vsyncadd [#allocation3], %s20
      %s23 = sshll.u32 [#allocation2], 4
      %s24 = int_to_ptr.vmem [resolvable:$true] %s23
      %26 = dma.hbm_to_vmem [thread:$0]  %s0, 128, %s24, [#allocation3]
    $region5: #{batchnorm_running_forward.1} parent=1 // pred_fallthru
      _
    // Predicated region
    $region6: #{batchnorm_running_forward.1} parent=1 // pred_check
      _
    $region7: #{batchnorm_running_forward.1} parent=1 // pred_check_branch
      %28 = sbr.rel (0) target = $region9
    $region8: #{batchnorm_running_forward.1} parent=1 // pred_region
      _
    $region9: #{batchnorm_running_forward.1} parent=1 // pred_fallthru
      _
    // Predicated region
    $region10: #{batchnorm_running_forward.1} parent=1 // pred_check
      _
    $region11: #{batchnorm_running_forward.1} parent=1 // pred_check_branch
      %30 = sbr.rel (0) target = $region13
    $region12: #{batchnorm_running_forward.1} parent=1 // pred_region
      _
    $region13: #{batchnorm_running_forward.1} parent=1 // pred_fallthru
      _
    // Predicated region
    $region14: #{batchnorm_running_forward.1} parent=1 // pred_check
      _
    $region15: #{batchnorm_running_forward.1} parent=1 // pred_check_branch
      %32 = sbr.rel (0) target = $region17
    $region16: #{batchnorm_running_forward.1} parent=1 // pred_region
      _
    $region17: #{batchnorm_running_forward.1} parent=1 // pred_fallthru
      _
    // Predicated region
    $region18: #{batchnorm_running_forward.1} parent=1 // pred_check
      _
    $region19: #{batchnorm_running_forward.1} parent=1 // pred_check_branch
      %34 = sbr.rel (0) target = $region21
    $region20: #{batchnorm_running_forward.1} parent=1 // pred_region
      _
    $region21: #{batchnorm_running_forward.1} parent=1 // pred_fallthru
      _
    // Predicated region
    $region22: #{batchnorm_running_forward.1} parent=1 // pred_check
      _
    $region23: #{batchnorm_running_forward.1} parent=1 // pred_check_branch
      %36 = sbr.rel (0) target = $region25
    $region24: #{batchnorm_running_forward.1} parent=1 // pred_region
      %37 = dma.done [#allocation3], 128
    $region25: #{batchnorm_running_forward.1} parent=1 // pred_fallthru
      _
    %v38 = vld [vmem:[#allocation2] sm:$0xff]
    %v39 = vld [vmem:[%s1] sm:$0x1]
    %v40 = vld [vmem:[%s2] sm:$0x1]
    %vm41 = vcmask 130048
    %v42 = vsel %vm41, %v38, 0.0
    %v43 = vrot.slane %v42, 4
    %v44 = vadd.f32 %v42, %v43
    %v45 = vrot.slane %v44, 2
    %v46 = vadd.f32 %v44, %v45
    %v47 = vrot.slane %v46, 1
    %v48 = vadd.f32 %v46, %v47
    %v49 = vmul.f32 %v48, 0.125
    %v50 = vsub.f32 %v38, %v49
    %v51 = vmul.f32 %v50, %v50
    %v52 = vsel %vm41, %v51, 0.0
    %v53 = vrot.slane %v52, 4
    %v54 = vadd.f32 %v52, %v53
    %v55 = vrot.slane %v54, 2
    %v56 = vadd.f32 %v54, %v55
    %v57 = vrot.slane %v56, 1
    %v58 = vadd.f32 %v56, %v57
    %v59 = vmul.f32 %v58, 0.14285715
    %v60 = vadd.f32 %v59, 1e-05
    %v61 = vld [vmem:[%s3] sm:$0x1]
    %v62 = vmul.f32 %v61, 0.99
    %v63 = vmul.f32 %v49, 0.01
    %v64 = vadd.f32 %v62, %v63
    %vm65 = vcmask 122880
    %66 = vst.msk [vmem:[#allocation6] sm:$0x1] %vm65, %v64
    %v67 = vld [vmem:[%s4] sm:$0x1]
    %v68 = vmul.f32 %v67, 0.99
    %v69 = vmul.f32 %v60, 0.01
    %v70 = vadd.f32 %v68, %v69
    %71 = vst.msk [vmem:[#allocation8] sm:$0x1] %vm65, %v70
    %v72 = vrsqrt.pop %v60
    %v73 = vmul.f32 %v39, 1.442695
    %v74 = vpow.pop %v73
    %v75 = vmul.f32 %v72, %v74
    %v76 = vlaneseq
    %v77 = vshrl.u32 %v76, 7
    %v78 = vsub.s32 0, %v77
    %v79 = vrot.slane %v75, %v78
    %v80 = vmul.f32 %v50, %v79
    %v82 = vlaneseq
    %v83 = vshrl.u32 %v82, 7
    %v84 = vsub.s32 0, %v83
    %v85 = vrot.slane %v40, %v84
    %v87 = vadd.f32 %v80, %v85
    %88 = vst.msk [vmem:[#allocation5] sm:$0xff] %vm41, %v87
    %v89 = vlog2.pop %v60
    %v90 = vmul.f32 %v89, 0.6931472
    %v91 = vmul.f32 %v90, 0.5
    %v92 = vsub.f32 %v39, %v91
    %93 = vst.msk [vmem:[%s8] sm:$0x1] %vm65, %v92
    // Predicated region
    $region26: #{batchnorm_running_forward.1} parent=1 // pred_check
      _
    $region27: #{batchnorm_running_forward.1} parent=1 // pred_check_branch
      %95 = sbr.rel (0) target = $region29
    $region28: #{batchnorm_running_forward.1} parent=1 // pred_region
      %s97 = ssub.s32 128, 128
      %98 = vsyncadd [#allocation4], %s97
      %s100 = sshll.u32 [#allocation5], 4
      %s101 = int_to_ptr.vmem [resolvable:$true] %s100
      %103 = dma.vmem_to_hbm [thread:$0]  %s101, 128, %s5, [#allocation4]
    $region29: #{batchnorm_running_forward.1} parent=1 // pred_fallthru
      _
    // Predicated region
    $region30: #{batchnorm_running_forward.1} parent=1 // pred_check
      _
    $region31: #{batchnorm_running_forward.1} parent=1 // pred_check_branch
      %105 = sbr.rel (0) target = $region33
    $region32: #{batchnorm_running_forward.1} parent=1 // pred_region
      %s107 = ssub.s32 16, 16
      %108 = vsyncadd [#allocation7], %s107
      %s110 = sshll.u32 [#allocation6], 4
      %s111 = int_to_ptr.vmem [resolvable:$true] %s110
      %113 = dma.vmem_to_hbm [thread:$0]  %s111, 16, %s6, [#allocation7]
    $region33: #{batchnorm_running_forward.1} parent=1 // pred_fallthru
      _
    // Predicated region
    $region34: #{batchnorm_running_forward.1} parent=1 // pred_check
      _
    $region35: #{batchnorm_running_forward.1} parent=1 // pred_check_branch
      %115 = sbr.rel (0) target = $region37
    $region36: #{batchnorm_running_forward.1} parent=1 // pred_region
      %s117 = ssub.s32 16, 16
      %118 = vsyncadd [#allocation7], %s117
      %s120 = sshll.u32 [#allocation8], 4
      %s121 = int_to_ptr.vmem [resolvable:$true] %s120
      %123 = dma.vmem_to_hbm [thread:$0]  %s121, 16, %s7, [#allocation7]
    $region37: #{batchnorm_running_forward.1} parent=1 // pred_fallthru
      _
    // Predicated region
    $region38: #{batchnorm_running_forward.1} parent=1 // pred_check
      _
    $region39: #{batchnorm_running_forward.1} parent=1 // pred_check_branch
      %125 = sbr.rel (0) target = $region41
    $region40: #{batchnorm_running_forward.1} parent=1 // pred_region
      _
    $region41: #{batchnorm_running_forward.1} parent=1 // pred_fallthru
      _
    // Predicated region
    $region42: #{batchnorm_running_forward.1} parent=1 // pred_check
      _
    $region43: #{batchnorm_running_forward.1} parent=1 // pred_check_branch
      %127 = sbr.rel (0) target = $region45
    $region44: #{batchnorm_running_forward.1} parent=1 // pred_region
      %128 = dma.done [#allocation4], 128
    $region45: #{batchnorm_running_forward.1} parent=1 // pred_fallthru
      _
    // Predicated region
    $region46: #{batchnorm_running_forward.1} parent=1 // pred_check
      _
    $region47: #{batchnorm_running_forward.1} parent=1 // pred_check_branch
      %130 = sbr.rel (0) target = $region49
    $region48: #{batchnorm_running_forward.1} parent=1 // pred_region
      %131 = dma.done [#allocation7], 16
    $region49: #{batchnorm_running_forward.1} parent=1 // pred_fallthru
      _
    // Predicated region
    $region50: #{batchnorm_running_forward.1} parent=1 // pred_check
      _
    $region51: #{batchnorm_running_forward.1} parent=1 // pred_check_branch
      %133 = sbr.rel (0) target = $region53
    $region52: #{batchnorm_running_forward.1} parent=1 // pred_region
      %134 = dma.done [#allocation7], 16
    $region53: #{batchnorm_running_forward.1} parent=1 // pred_fallthru
      _
    // Predicated region
    $region54: #{batchnorm_running_forward.1} parent=1 // pred_check
      _
    $region55: #{batchnorm_running_forward.1} parent=1 // pred_check_branch
      %136 = sbr.rel (0) target = $region57
    $region56: #{batchnorm_running_forward.1} parent=1 // pred_region
      _
    $region57: #{batchnorm_running_forward.1} parent=1 // pred_fallthru
      _
    %137 = vsyncpa [#allocation3], 1
    %138 = vsyncpa [#allocation4], 1
    %139 = vsyncpa [#allocation7], 1

</llo_original>
